<compile_context>
chip_gen: v7x
topology: tpu7x:2x2x1
jax: 0.10.0
libtpu: 0.0.40
codegen_flags: <defaults>
</compile_context>

<pallas_src>
import functools

import numpy as np

import jax
import jax.numpy as jnp
from jax import lax
from jax.experimental import pallas as pl
from jax.experimental.pallas import tpu as pltpu

_LANE = 128
_BLOCK = 128          # tq == tk; multiple of 128 -> MXU cadence, tiny VMEM/step
_NEG_BIG = -1e30      # applied only to f32 scores


def _flash_seg_attention_kernel(
    tmin_ref, tmax_ref,            # SMEM scalar prefetch: per-tile seg-id range
    seg_col_ref, seg_row_ref,      # (tq,1) / (1,tk) int32 segment ids
    hq_ref, hkv_ref,               # (tq,Dp) / (tk,Dp) bf16 hidden states
    o_ref,                         # (tq,Dp) f32 output
    m_sc, l_sc, acc_sc,            # online-softmax scratch (f32)
):
    qi = pl.program_id(0)
    ki = pl.program_id(1)

    @pl.when(ki == 0)
    def _init():
        m_sc[...] = jnp.full_like(m_sc, -jnp.inf)
        l_sc[...] = jnp.zeros_like(l_sc)
        acc_sc[...] = jnp.zeros_like(acc_sc)

    # Segments are contiguous, so every tile covers a contiguous interval of
    # segment ids; disjoint intervals share no segment -> skip the whole tile.
    intersects = jnp.logical_and(tmax_ref[qi] >= tmin_ref[ki],
                                 tmax_ref[ki] >= tmin_ref[qi])

    @pl.when(intersects)
    def _tile():
        hq = hq_ref[...]                                  # (tq, Dp) bf16
        hkv = hkv_ref[...]                                # (tk, Dp) bf16
        # hq @ hkv.T without materializing a transpose: contract last dims.
        score = lax.dot_general(
            hq, hkv, dimension_numbers=(((1,), (1,)), ((), ())),
            preferred_element_type=jnp.float32)           # (tq, tk) f32
        mask = seg_col_ref[...] == seg_row_ref[...]       # (tq,1)==(1,tk)
        score = jnp.where(mask, score, _NEG_BIG)          # mask in f32 only

        m_prev = m_sc[...]
        m_new = jnp.maximum(m_prev, jnp.max(score, axis=-1, keepdims=True))
        alpha = jnp.exp(m_prev - m_new)
        p = jnp.exp(score - m_new)                        # f32 probs (unnormed)
        l_sc[...] = alpha * l_sc[...] + jnp.sum(p, axis=-1, keepdims=True)
        acc_sc[...] = alpha * acc_sc[...] + jnp.dot(
            p.astype(hkv.dtype), hkv, preferred_element_type=jnp.float32)
        m_sc[...] = m_new

    @pl.when(ki == pl.num_programs(1) - 1)
    def _finalize():
        inv_l = pl.reciprocal(l_sc[...], approx=True)
        o_ref[...] = (acc_sc[...] * inv_l).astype(o_ref.dtype)


@functools.partial(jax.jit, static_argnames=("block",))
def _segmented_self_attention(h_pad, seg_col, seg_row, tile_min, tile_max, *,
                              block):
    """h_pad: (N_pad, D_pad) bf16; returns (N_pad, D_pad) f32."""
    n_pad, d_pad = h_pad.shape
    nq = n_pad // block
    nk = n_pad // block

    grid_spec = pltpu.PrefetchScalarGridSpec(
        num_scalar_prefetch=2,
        grid=(nq, nk),
        in_specs=[
            pl.BlockSpec((block, 1), lambda qi, ki, tmin, tmax: (qi, 0)),
            pl.BlockSpec((1, block), lambda qi, ki, tmin, tmax: (0, ki)),
            pl.BlockSpec((block, d_pad), lambda qi, ki, tmin, tmax: (qi, 0)),
            pl.BlockSpec((block, d_pad), lambda qi, ki, tmin, tmax: (ki, 0)),
        ],
        out_specs=pl.BlockSpec((block, d_pad), lambda qi, ki, tmin, tmax: (qi, 0)),
        scratch_shapes=[
            pltpu.VMEM((block, 1), jnp.float32),        # m
            pltpu.VMEM((block, 1), jnp.float32),        # l
            pltpu.VMEM((block, d_pad), jnp.float32),    # acc
        ],
    )
    return pl.pallas_call(
        _flash_seg_attention_kernel,
        out_shape=jax.ShapeDtypeStruct((n_pad, d_pad), jnp.float32),
        grid_spec=grid_spec,
        compiler_params=pltpu.CompilerParams(
            dimension_semantics=("parallel", "arbitrary")),
    )(tile_min, tile_max, seg_col, seg_row, h_pad, h_pad)


def attention_hidden_forward(h_states, seq_start_end, h_dim, *,
                             block=_BLOCK, compute_dtype=jnp.bfloat16):
    """h_states: (num_layers, batch, h_dim) -> concat over segments of attn @ H."""
    h_flat = h_states.reshape(-1, h_dim).astype(jnp.float32)
    n, d = h_flat.shape
    n_pad = max(block, ((n + block - 1) // block) * block)
    d_pad = max(_LANE, ((d + _LANE - 1) // _LANE) * _LANE)

    # Host-side (numpy) segment metadata -- no per-segment XLA dispatches.
    num_segs = len(seq_start_end)
    seg = np.full((n_pad,), num_segs, dtype=np.int32)   # pad rows/cols: own id
    for sid, (start, end) in enumerate(seq_start_end):
        seg[int(start):int(end)] = sid
    n_tiles = n_pad // block
    seg_tiles = seg.reshape(n_tiles, block)
    tile_min = jnp.asarray(seg_tiles.min(axis=1).astype(np.int32))
    tile_max = jnp.asarray(seg_tiles.max(axis=1).astype(np.int32))
    seg_col = jnp.asarray(seg.reshape(n_pad, 1))
    seg_row = jnp.asarray(seg.reshape(1, n_pad))

    h_pad = jnp.pad(h_flat.astype(compute_dtype),
                    ((0, n_pad - n), (0, d_pad - d)))

    out_pad = _segmented_self_attention(
        h_pad, seg_col, seg_row, tile_min, tile_max, block=block)
    out = out_pad[:n, :d]
    # Reference concatenates only the rows covered by seq_start_end, in order.
    return jnp.concatenate(
        [out[int(s):int(e)] for (s, e) in seq_start_end], axis=0)


class AttentionHiddenNetPallas:
    """JAX/Pallas port of AttentionHiddenNet (forward only).

    The reference __init__ also builds spatial_embedding and mlp_pre_pool, but
    forward() never uses them (nor end_pos); they are omitted here on purpose.
    """

    def __init__(self, embedding_dim=32, h_dim=32, pool_dim=64):
        self.embedding_dim = embedding_dim
        self.h_dim = h_dim
        self.pool_dim = pool_dim
        # TODO(synk): spatial_embedding / mlp_pre_pool parameters exist in the
        # PyTorch __init__ but are unused by forward(); not instantiated here.

    def forward(self, h_states, seq_start_end, end_pos=None):
        del end_pos  # unused, matches reference forward()
        return attention_hidden_forward(h_states, seq_start_end, self.h_dim)


def _reference_jax(h_states, seq_start_end, h_dim):
    """Pure-JAX f32 replica of the PyTorch per-segment loop, for verification."""
    h_flat = h_states.reshape(-1, h_dim).astype(jnp.float32)
    outs = []
    for start, end in seq_start_end:
        curr = h_flat[int(start):int(end)]
        score = curr @ curr.T
        attn = jax.nn.softmax(score, axis=1)
        outs.append(attn @ curr)
    return jnp.concatenate(outs, axis=0)


if __name__ == "__main__":
    key = jax.random.PRNGKey(0)
    k_h, k_p = jax.random.split(key)

    num_layers, batch, h_dim = 1, 8, 32
    h_states = jax.random.normal(k_h, (num_layers, batch, h_dim),
                                 dtype=jnp.float32)
    end_pos = jax.random.normal(k_p, (batch, 2), dtype=jnp.float32)
    seq_start_end = [(0, 3), (3, 8)]

    net = AttentionHiddenNetPallas(embedding_dim=32, h_dim=h_dim, pool_dim=64)
    out = net.forward(h_states, seq_start_end, end_pos)
    out = jax.block_until_ready(out)

    ref = _reference_jax(h_states, seq_start_end, h_dim)
    assert out.shape == (batch, h_dim), out.shape
    # Kernel feeds the MXU bf16 operands (per perf review); compare against the
    # exact-f32 semantic reference with a tolerance covering bf16 rounding.
    max_err = float(jnp.max(jnp.abs(out - ref)))
    assert max_err < 5e-2, max_err
    print("KERNEL_OK")
</pallas_src>

<mosaic_0001>
module attributes {stable_mosaic.version = 11 : i64} {
  func.func @_flash_seg_attention_kernel(%arg0: i32, %arg1: i32, %arg2: memref<1xi32, #tpu.memory_space<smem>>, %arg3: memref<1xi32, #tpu.memory_space<smem>>, %arg4: memref<128x1xi32, #tpu.memory_space<vmem>>, %arg5: memref<1x128xi32, #tpu.memory_space<vmem>>, %arg6: memref<128x128xbf16, #tpu.memory_space<vmem>>, %arg7: memref<128x128xbf16, #tpu.memory_space<vmem>>, %arg8: memref<128x128xf32, #tpu.memory_space<vmem>>, %arg9: memref<128x1xf32, #tpu.memory_space<vmem>>, %arg10: memref<128x1xf32, #tpu.memory_space<vmem>>, %arg11: memref<128x128xf32, #tpu.memory_space<vmem>>) attributes {dimension_semantics = [#tpu.dimension_semantics<parallel>, #tpu.dimension_semantics<arbitrary>], iteration_bounds = array<i64: 1, 1>, scalar_prefetch = 2 : i64, scratch_operands = 3 : i64, tpu.core_type = #tpu.core_type<tc>, window_params = [{transform_indices = @transform_0, window_bounds = array<i64: 128, 1>}, {transform_indices = @transform_1, window_bounds = array<i64: 1, 128>}, {transform_indices = @transform_2, window_bounds = array<i64: 128, 128>}, {transform_indices = @transform_3, window_bounds = array<i64: 128, 128>}, {transform_indices = @transform_4, window_bounds = array<i64: 128, 128>}]} {
    %c0_i32 = arith.constant 0 : i32
    %0 = arith.cmpi eq, %arg1, %c0_i32 : i32
    %1 = arith.extui %0 : i1 to i32
    %c0_i32_0 = arith.constant 0 : i32
    %2 = arith.cmpi ne, %1, %c0_i32_0 : i32
    scf.if %2 {
      %cst = arith.constant 0xFF800000 : f32
      %19 = vector.broadcast %cst : f32 to vector<128x1xf32>
      %c0 = arith.constant 0 : index
      %c0_4 = arith.constant 0 : index
      %20 = vector.load %arg9[%c0, %c0_4] : memref<128x1xf32, #tpu.memory_space<vmem>>, vector<128x1xf32>
      tpu.vector_store %arg9[%c0, %c0_4], %19 {strides = array<i32>} : memref<128x1xf32, #tpu.memory_space<vmem>>, vector<128x1xf32>,
      %cst_5 = arith.constant 0.000000e+00 : f32
      %21 = vector.broadcast %cst_5 : f32 to vector<128x1xf32>
      %c0_6 = arith.constant 0 : index
      %c0_7 = arith.constant 0 : index
      %22 = vector.load %arg10[%c0_6, %c0_7] : memref<128x1xf32, #tpu.memory_space<vmem>>, vector<128x1xf32>
      tpu.vector_store %arg10[%c0_6, %c0_7], %21 {strides = array<i32>} : memref<128x1xf32, #tpu.memory_space<vmem>>, vector<128x1xf32>,
      %cst_8 = arith.constant 0.000000e+00 : f32
      %23 = vector.broadcast %cst_8 : f32 to vector<128x128xf32>
      %c0_9 = arith.constant 0 : index
      %c0_10 = arith.constant 0 : index
      %24 = vector.load %arg11[%c0_9, %c0_10] : memref<128x128xf32, #tpu.memory_space<vmem>>, vector<128x128xf32>
      tpu.vector_store %arg11[%c0_9, %c0_10], %23 {strides = array<i32>} : memref<128x128xf32, #tpu.memory_space<vmem>>, vector<128x128xf32>,
    } else {
    }
    %3 = arith.index_cast %arg0 : i32 to index
    %4 = memref.load %arg3[%3] : memref<1xi32, #tpu.memory_space<smem>>
    %5 = arith.index_cast %arg1 : i32 to index
    %6 = memref.load %arg2[%5] : memref<1xi32, #tpu.memory_space<smem>>
    %7 = arith.cmpi sge, %4, %6 : i32
    %8 = arith.index_cast %arg1 : i32 to index
    %9 = memref.load %arg3[%8] : memref<1xi32, #tpu.memory_space<smem>>
    %10 = arith.index_cast %arg0 : i32 to index
    %11 = memref.load %arg2[%10] : memref<1xi32, #tpu.memory_space<smem>>
    %12 = arith.cmpi sge, %9, %11 : i32
    %13 = arith.andi %7, %12 : i1
    %14 = arith.extui %13 : i1 to i32
    %c0_i32_1 = arith.constant 0 : i32
    %15 = arith.cmpi ne, %14, %c0_i32_1 : i32
    scf.if %15 {
      %c0 = arith.constant 0 : index
      %c0_4 = arith.constant 0 : index
      %19 = vector.load %arg6[%c0, %c0_4] : memref<128x128xbf16, #tpu.memory_space<vmem>>, vector<128x128xbf16>
      %c0_5 = arith.constant 0 : index
      %c0_6 = arith.constant 0 : index
      %20 = vector.load %arg7[%c0_5, %c0_6] : memref<128x128xbf16, #tpu.memory_space<vmem>>, vector<128x128xbf16>
      %cst = arith.constant dense<0.000000e+00> : vector<128x128xf32>
      %21 = tpu.matmul %19, %20, %cst {dimension_numbers = #tpu.dot_dimension_numbers<[1], [1], [0], [0], [0, 0, 1, 0], [], []>} : vector<128x128xbf16>, vector<128x128xbf16>, vector<128x128xf32> -> vector<128x128xf32>
      %c0_7 = arith.constant 0 : index
      %c0_8 = arith.constant 0 : index
      %22 = vector.load %arg4[%c0_7, %c0_8] : memref<128x1xi32, #tpu.memory_space<vmem>>, vector<128x1xi32>
      %c0_9 = arith.constant 0 : index
      %c0_10 = arith.constant 0 : index
      %23 = vector.load %arg5[%c0_9, %c0_10] : memref<1x128xi32, #tpu.memory_space<vmem>>, vector<1x128xi32>
      %24 = vector.broadcast %22 : vector<128x1xi32> to vector<128x128xi32>
      %25 = vector.broadcast %23 : vector<1x128xi32> to vector<128x128xi32>
      %26 = arith.cmpi eq, %24, %25 : vector<128x128xi32>
      %cst_11 = arith.constant -1.000000e+30 : f32
      %27 = vector.broadcast %cst_11 : f32 to vector<128x128xf32>
      %28 = arith.select %26, %21, %27 : vector<128x128xi1>, vector<128x128xf32>
      %c0_12 = arith.constant 0 : index
      %c0_13 = arith.constant 0 : index
      %29 = vector.load %arg9[%c0_12, %c0_13] : memref<128x1xf32, #tpu.memory_space<vmem>>, vector<128x1xf32>
      %cst_14 = arith.constant dense<0xFF800000> : vector<128xf32>
      %30 = vector.multi_reduction <maximumf>, %28, %cst_14 [1] : vector<128x128xf32> to vector<128xf32>
      %31 = vector.shape_cast %30 : vector<128xf32> to vector<128x1xf32>
      %32 = arith.maximumf %29, %31 : vector<128x1xf32>
      %33 = arith.subf %29, %32 : vector<128x1xf32>
      %34 = math.exp %33 : vector<128x1xf32>
      %35 = vector.broadcast %32 : vector<128x1xf32> to vector<128x128xf32>
      %36 = arith.subf %28, %35 : vector<128x128xf32>
      %37 = math.exp %36 : vector<128x128xf32>
      %c0_15 = arith.constant 0 : index
      %c0_16 = arith.constant 0 : index
      %38 = vector.load %arg10[%c0_15, %c0_16] : memref<128x1xf32, #tpu.memory_space<vmem>>, vector<128x1xf32>
      %39 = arith.mulf %34, %38 : vector<128x1xf32>
      %cst_17 = arith.constant dense<0.000000e+00> : vector<128xf32>
      %40 = vector.multi_reduction <add>, %37, %cst_17 [1] : vector<128x128xf32> to vector<128xf32>
      %41 = vector.shape_cast %40 : vector<128xf32> to vector<128x1xf32>
      %42 = arith.addf %39, %41 : vector<128x1xf32>
      %c0_18 = arith.constant 0 : index
      %c0_19 = arith.constant 0 : index
      %43 = vector.load %arg10[%c0_18, %c0_19] : memref<128x1xf32, #tpu.memory_space<vmem>>, vector<128x1xf32>
      tpu.vector_store %arg10[%c0_18, %c0_19], %42 {strides = array<i32>} : memref<128x1xf32, #tpu.memory_space<vmem>>, vector<128x1xf32>,
      %c0_20 = arith.constant 0 : index
      %c0_21 = arith.constant 0 : index
      %44 = vector.load %arg11[%c0_20, %c0_21] : memref<128x128xf32, #tpu.memory_space<vmem>>, vector<128x128xf32>
      %45 = vector.broadcast %34 : vector<128x1xf32> to vector<128x128xf32>
      %46 = arith.mulf %45, %44 : vector<128x128xf32>
      %47 = arith.truncf %37 : vector<128x128xf32> to vector<128x128xbf16>
      %cst_22 = arith.constant dense<0.000000e+00> : vector<128x128xf32>
      %48 = tpu.matmul %47, %20, %cst_22 {dimension_numbers = #tpu.dot_dimension_numbers<[1], [0], [0], [1], [0, 0, 1, 1], [], []>} : vector<128x128xbf16>, vector<128x128xbf16>, vector<128x128xf32> -> vector<128x128xf32>
      %49 = arith.addf %46, %48 : vector<128x128xf32>
      %c0_23 = arith.constant 0 : index
      %c0_24 = arith.constant 0 : index
      %50 = vector.load %arg11[%c0_23, %c0_24] : memref<128x128xf32, #tpu.memory_space<vmem>>, vector<128x128xf32>
      tpu.vector_store %arg11[%c0_23, %c0_24], %49 {strides = array<i32>} : memref<128x128xf32, #tpu.memory_space<vmem>>, vector<128x128xf32>,
      %c0_25 = arith.constant 0 : index
      %c0_26 = arith.constant 0 : index
      %51 = vector.load %arg9[%c0_25, %c0_26] : memref<128x1xf32, #tpu.memory_space<vmem>>, vector<128x1xf32>
      tpu.vector_store %arg9[%c0_25, %c0_26], %32 {strides = array<i32>} : memref<128x1xf32, #tpu.memory_space<vmem>>, vector<128x1xf32>,
    } else {
    }
    %c0_i32_2 = arith.constant 0 : i32
    %16 = arith.cmpi eq, %arg1, %c0_i32_2 : i32
    %17 = arith.extui %16 : i1 to i32
    %c0_i32_3 = arith.constant 0 : i32
    %18 = arith.cmpi ne, %17, %c0_i32_3 : i32
    scf.if %18 {
      %c0 = arith.constant 0 : index
      %c0_4 = arith.constant 0 : index
      %19 = vector.load %arg10[%c0, %c0_4] : memref<128x1xf32, #tpu.memory_space<vmem>>, vector<128x1xf32>
      %20 = tpu.reciprocal %19 {approx = true} : vector<128x1xf32> -> vector<128x1xf32>
      %c0_5 = arith.constant 0 : index
      %c0_6 = arith.constant 0 : index
      %21 = vector.load %arg11[%c0_5, %c0_6] : memref<128x128xf32, #tpu.memory_space<vmem>>, vector<128x128xf32>
      %22 = vector.broadcast %20 : vector<128x1xf32> to vector<128x128xf32>
      %23 = arith.mulf %21, %22 : vector<128x128xf32>
      %c0_7 = arith.constant 0 : index
      %c0_8 = arith.constant 0 : index
      %24 = vector.load %arg8[%c0_7, %c0_8] : memref<128x128xf32, #tpu.memory_space<vmem>>, vector<128x128xf32>
      tpu.vector_store %arg8[%c0_7, %c0_8], %23 {strides = array<i32>} : memref<128x128xf32, #tpu.memory_space<vmem>>, vector<128x128xf32>,
    } else {
    }
    return
  }
  func.func @transform_0(%arg0: i32, %arg1: i32, %arg2: memref<1xi32, #tpu.memory_space<smem>>, %arg3: memref<1xi32, #tpu.memory_space<smem>>) -> (i32, i32) {
    %c0_i32 = arith.constant 0 : i32
    %c0_i32_0 = arith.constant 0 : i32
    return %arg0, %c0_i32 : i32, i32
  }
  func.func @transform_1(%arg0: i32, %arg1: i32, %arg2: memref<1xi32, #tpu.memory_space<smem>>, %arg3: memref<1xi32, #tpu.memory_space<smem>>) -> (i32, i32) {
    %c0_i32 = arith.constant 0 : i32
    %c0_i32_0 = arith.constant 0 : i32
    return %c0_i32, %arg1 : i32, i32
  }
  func.func @transform_2(%arg0: i32, %arg1: i32, %arg2: memref<1xi32, #tpu.memory_space<smem>>, %arg3: memref<1xi32, #tpu.memory_space<smem>>) -> (i32, i32) {
    %c0_i32 = arith.constant 0 : i32
    %c0_i32_0 = arith.constant 0 : i32
    return %arg0, %c0_i32 : i32, i32
  }
  func.func @transform_3(%arg0: i32, %arg1: i32, %arg2: memref<1xi32, #tpu.memory_space<smem>>, %arg3: memref<1xi32, #tpu.memory_space<smem>>) -> (i32, i32) {
    %c0_i32 = arith.constant 0 : i32
    %c0_i32_0 = arith.constant 0 : i32
    return %arg1, %c0_i32 : i32, i32
  }
  func.func @transform_4(%arg0: i32, %arg1: i32, %arg2: memref<1xi32, #tpu.memory_space<smem>>, %arg3: memref<1xi32, #tpu.memory_space<smem>>) -> (i32, i32) {
    %c0_i32 = arith.constant 0 : i32
    %c0_i32_0 = arith.constant 0 : i32
    return %arg0, %c0_i32 : i32, i32
  }
}

</mosaic_0001>

<llo_original>
// kernel: _segmented_self_attention.1
$region0: #{_segmented_self_attention.1}
  #allocation0 [shape = 'u32[]', space=smem, size = 0x4, offset = 0x4, fixed_abs, tag = 'smem constant byte address 0x4 - core index']
  #allocation1 [shape = 'u32[144,128]{1,0:T(1,128)}', space=vmem, size = 0x12000, scoped, tag = 'internal scratch']
  #allocation2 [shape = 'f32[128,1]{1,0:T(8,128)}', space=vmem, size = 0x10000, scoped, tag = 'scratch operand']
  #allocation3 [shape = 'f32[128,1]{1,0:T(8,128)}', space=vmem, size = 0x10000, scoped, tag = 'scratch operand']
  #allocation4 [shape = 'f32[128,128]{1,0:T(8,128)}', space=vmem, size = 0x10000, scoped, tag = 'scratch operand']
  #allocation5 [shape = 's32[1]{0}', space=sflag, size = 0x4, scoped, tag = 'scoped memory for _segmented_self_attention.1']
  #allocation6 [shape = 's32[1]{0:T(128)S(6)}', space=smem, size = 0x200, scoped, tag = 'prefetched SMEM operand 0']
  #allocation7 [shape = 's32[1]{0:T(128)S(6)}', space=smem, size = 0x200, scoped, tag = 'prefetched SMEM operand 1']
  %s0 = inlined_call_operand.<no memory space> [shape: s32[1], index: 0, kind: input, shape index: {}]
  %s1 = inlined_call_operand.<no memory space> [shape: s32[1], index: 1, kind: input, shape index: {}]
  %s2 = inlined_call_operand.vmem [shape: s32[128,1], index: 2, kind: input, shape index: {}]
  %s3 = inlined_call_operand.vmem [shape: s32[1,128], index: 3, kind: input, shape index: {}]
  %s4 = inlined_call_operand.vmem [shape: bf16[128,128], index: 4, kind: input, shape index: {}, may-alias: {4,5}]
  %s5 = inlined_call_operand.vmem [shape: bf16[128,128], index: 5, kind: input, shape index: {}, may-alias: {4,5}]
  %s6 = inlined_call_operand.hbm [shape: f32[128,128], index: 6, kind: output, shape index: {}]
  %s7 = sld [smem:[#allocation0]]
  $region38: #{_segmented_self_attention.1} parent=0
    _
  %s9 = ssub.s32 1, %s7
  %s10 = scalar_select 0, %s9, %s7
  %11 = sst [smem:[#allocation6]] %s0
  %12 = sst [smem:[#allocation7]] %s1
  $region1: #{_segmented_self_attention.1} parent=0
    #allocation8 [shape = 'u8[65536]{0}', space=vmem, size = 0x10000, scoped, tag = 'output window, operand 0, single buffered']
    #allocation9 [shape = 's32[1]{0}', space=sflag, size = 0x4, scoped, tag = 'scoped memory for _segmented_self_attention.1']
    %13 = vsyncpa [#allocation9], 0
    // Predicated region
    $region2: #{_segmented_self_attention.1} parent=1 // pred_check
      _
    $region3: #{_segmented_self_attention.1} parent=1 // pred_check_branch
      %15 = sbr.rel (0) target = $region5
    $region4: #{_segmented_self_attention.1} parent=1 // pred_region
      _
    $region5: #{_segmented_self_attention.1} parent=1 // pred_fallthru
      _
    // Predicated region
    $region6: #{_segmented_self_attention.1} parent=1 // pred_check
      _
    $region7: #{_segmented_self_attention.1} parent=1 // pred_check_branch
      %17 = sbr.rel (0) target = $region9
    $region8: #{_segmented_self_attention.1} parent=1 // pred_region
      _
    $region9: #{_segmented_self_attention.1} parent=1 // pred_fallthru
      _
    // Predicated region
    $region10: #{_segmented_self_attention.1} parent=1 // pred_check
      _
    $region11: #{_segmented_self_attention.1} parent=1 // pred_check_branch
      %19 = sbr.rel (0) target = $region13
    $region12: #{_segmented_self_attention.1} parent=1 // pred_region
      _
    $region13: #{_segmented_self_attention.1} parent=1 // pred_fallthru
      _
    // Predicated region
    $region14: #{_segmented_self_attention.1} parent=1 // pred_check
      _
    $region15: #{_segmented_self_attention.1} parent=1 // pred_check_branch
      %21 = sbr.rel (0) target = $region17
    $region16: #{_segmented_self_attention.1} parent=1 // pred_region
      _
    $region17: #{_segmented_self_attention.1} parent=1 // pred_fallthru
      _
    %p23 = scmp.eq.s32.totalorder 0, 0
    // Predicated region
    $region18: #{_segmented_self_attention.1} parent=1 // pred_check
      %p24 = pneg %p23
    $region19: #{_segmented_self_attention.1} parent=1 // pred_check_branch
      %26 = sbr.rel (%p24) target = $region21
    $region20: #{_segmented_self_attention.1} parent=1 // pred_region
      %vm27 = vcmask 7168
      %28 = vst.msk [vmem:[#allocation2] sm:$0xff] %vm27, -inf
      %29 = vst.msk [vmem:[#allocation2 + $0x8] sm:$0xff] %vm27, -inf
      %30 = vst.msk [vmem:[#allocation2 + $0x10] sm:$0xff] %vm27, -inf
      %31 = vst.msk [vmem:[#allocation2 + $0x18] sm:$0xff] %vm27, -inf
      %32 = vst.msk [vmem:[#allocation2 + $0x20] sm:$0xff] %vm27, -inf
      %33 = vst.msk [vmem:[#allocation2 + $0x28] sm:$0xff] %vm27, -inf
      %34 = vst.msk [vmem:[#allocation2 + $0x30] sm:$0xff] %vm27, -inf
      %35 = vst.msk [vmem:[#allocation2 + $0x38] sm:$0xff] %vm27, -inf
      %36 = vst.msk [vmem:[#allocation2 + $0x40] sm:$0xff] %vm27, -inf
      %37 = vst.msk [vmem:[#allocation2 + $0x48] sm:$0xff] %vm27, -inf
      %38 = vst.msk [vmem:[#allocation2 + $0x50] sm:$0xff] %vm27, -inf
      %39 = vst.msk [vmem:[#allocation2 + $0x58] sm:$0xff] %vm27, -inf
      %40 = vst.msk [vmem:[#allocation2 + $0x60] sm:$0xff] %vm27, -inf
      %41 = vst.msk [vmem:[#allocation2 + $0x68] sm:$0xff] %vm27, -inf
      %42 = vst.msk [vmem:[#allocation2 + $0x70] sm:$0xff] %vm27, -inf
      %43 = vst.msk [vmem:[#allocation2 + $0x78] sm:$0xff] %vm27, -inf
      %44 = vst.msk [vmem:[#allocation3] sm:$0xff] %vm27, 0.0
      %45 = vst.msk [vmem:[#allocation3 + $0x8] sm:$0xff] %vm27, 0.0
      %46 = vst.msk [vmem:[#allocation3 + $0x10] sm:$0xff] %vm27, 0.0
      %47 = vst.msk [vmem:[#allocation3 + $0x18] sm:$0xff] %vm27, 0.0
      %48 = vst.msk [vmem:[#allocation3 + $0x20] sm:$0xff] %vm27, 0.0
      %49 = vst.msk [vmem:[#allocation3 + $0x28] sm:$0xff] %vm27, 0.0
      %50 = vst.msk [vmem:[#allocation3 + $0x30] sm:$0xff] %vm27, 0.0
      %51 = vst.msk [vmem:[#allocation3 + $0x38] sm:$0xff] %vm27, 0.0
      %52 = vst.msk [vmem:[#allocation3 + $0x40] sm:$0xff] %vm27, 0.0
      %53 = vst.msk [vmem:[#allocation3 + $0x48] sm:$0xff] %vm27, 0.0
      %54 = vst.msk [vmem:[#allocation3 + $0x50] sm:$0xff] %vm27, 0.0
      %55 = vst.msk [vmem:[#allocation3 + $0x58] sm:$0xff] %vm27, 0.0
      %56 = vst.msk [vmem:[#allocation3 + $0x60] sm:$0xff] %vm27, 0.0
      %57 = vst.msk [vmem:[#allocation3 + $0x68] sm:$0xff] %vm27, 0.0
      %58 = vst.msk [vmem:[#allocation3 + $0x70] sm:$0xff] %vm27, 0.0
      %59 = vst.msk [vmem:[#allocation3 + $0x78] sm:$0xff] %vm27, 0.0
      %60 = vst [vmem:[#allocation4] sm:$0xff] 0.0
      %61 = vst [vmem:[#allocation4 + $0x8] sm:$0xff] 0.0
      %62 = vst [vmem:[#allocation4 + $0x10] sm:$0xff] 0.0
      %63 = vst [vmem:[#allocation4 + $0x18] sm:$0xff] 0.0
      %64 = vst [vmem:[#allocation4 + $0x20] sm:$0xff] 0.0
      %65 = vst [vmem:[#allocation4 + $0x28] sm:$0xff] 0.0
      %66 = vst [vmem:[#allocation4 + $0x30] sm:$0xff] 0.0
      %67 = vst [vmem:[#allocation4 + $0x38] sm:$0xff] 0.0
      %68 = vst [vmem:[#allocation4 + $0x40] sm:$0xff] 0.0
      %69 = vst [vmem:[#allocation4 + $0x48] sm:$0xff] 0.0
      %70 = vst [vmem:[#allocation4 + $0x50] sm:$0xff] 0.0
      %71 = vst [vmem:[#allocation4 + $0x58] sm:$0xff] 0.0
      %72 = vst [vmem:[#allocation4 + $0x60] sm:$0xff] 0.0
      %73 = vst [vmem:[#allocation4 + $0x68] sm:$0xff] 0.0
      %74 = vst [vmem:[#allocation4 + $0x70] sm:$0xff] 0.0
      %75 = vst [vmem:[#allocation4 + $0x78] sm:$0xff] 0.0
    $region21: #{_segmented_self_attention.1} parent=1 // pred_fallthru
      _
    %s76 = sld [smem:[#allocation7]]
    %s77 = sld [smem:[#allocation6]]
    %p78 = scmp.ge.s32.totalorder %s76, %s77
    %s79 = sld [smem:[#allocation7]]
    %s80 = sld [smem:[#allocation6]]
    %p81 = scmp.ge.s32.totalorder %s79, %s80
    %p82 = pnand %p78, %p81
    %p83 = pneg %p82
    // Predicated region
    $region22: #{_segmented_self_attention.1} parent=1 // pred_check
      _
    $region23: #{_segmented_self_attention.1} parent=1 // pred_check_branch
      %85 = sbr.rel (%p82) target = $region25
    $region24: #{_segmented_self_attention.1} parent=1 // pred_region
      %v86 = vld [vmem:[%s4] sm:$0xf]
      %v87 = vld [vmem:[%s4 + $0x4] sm:$0xf]
      %v88 = vld [vmem:[%s4 + $0x8] sm:$0xf]
      %v89 = vld [vmem:[%s4 + $0xc] sm:$0xf]
      %v90 = vld [vmem:[%s4 + $0x10] sm:$0xf]
      %v91 = vld [vmem:[%s4 + $0x14] sm:$0xf]
      %v92 = vld [vmem:[%s4 + $0x18] sm:$0xf]
      %v93 = vld [vmem:[%s4 + $0x1c] sm:$0xf]
      %v94 = vld [vmem:[%s4 + $0x20] sm:$0xf]
      %v95 = vld [vmem:[%s4 + $0x24] sm:$0xf]
      %v96 = vld [vmem:[%s4 + $0x28] sm:$0xf]
      %v97 = vld [vmem:[%s4 + $0x2c] sm:$0xf]
      %v98 = vld [vmem:[%s4 + $0x30] sm:$0xf]
      %v99 = vld [vmem:[%s4 + $0x34] sm:$0xf]
      %v100 = vld [vmem:[%s4 + $0x38] sm:$0xf]
      %v101 = vld [vmem:[%s4 + $0x3c] sm:$0xf]
      %v102 = vld [vmem:[%s5] sm:$0xf]
      %v103 = vld [vmem:[%s5 + $0x4] sm:$0xf]
      %v104 = vld [vmem:[%s5 + $0x8] sm:$0xf]
      %v105 = vld [vmem:[%s5 + $0xc] sm:$0xf]
      %v106 = vld [vmem:[%s5 + $0x10] sm:$0xf]
      %v107 = vld [vmem:[%s5 + $0x14] sm:$0xf]
      %v108 = vld [vmem:[%s5 + $0x18] sm:$0xf]
      %v109 = vld [vmem:[%s5 + $0x1c] sm:$0xf]
      %v110 = vld [vmem:[%s5 + $0x20] sm:$0xf]
      %v111 = vld [vmem:[%s5 + $0x24] sm:$0xf]
      %v112 = vld [vmem:[%s5 + $0x28] sm:$0xf]
      %v113 = vld [vmem:[%s5 + $0x2c] sm:$0xf]
      %v114 = vld [vmem:[%s5 + $0x30] sm:$0xf]
      %v115 = vld [vmem:[%s5 + $0x34] sm:$0xf]
      %v116 = vld [vmem:[%s5 + $0x38] sm:$0xf]
      %v117 = vld [vmem:[%s5 + $0x3c] sm:$0xf]
      %v134 = vunpack.c.l.b16 %v86
      %v135 = vunpack.c.l.b16 %v87
      %v136 = vunpack.c.l.b16 %v88
      %v137 = vunpack.c.l.b16 %v89
      %v138 = vunpack.c.l.b16 %v90
      %v139 = vunpack.c.l.b16 %v91
      %v140 = vunpack.c.l.b16 %v92
      %v141 = vunpack.c.l.b16 %v93
      %v142 = vunpack.c.l.b16 %v94
      %v143 = vunpack.c.l.b16 %v95
      %v144 = vunpack.c.l.b16 %v96
      %v145 = vunpack.c.l.b16 %v97
      %v146 = vunpack.c.l.b16 %v98
      %v147 = vunpack.c.l.b16 %v99
      %v148 = vunpack.c.l.b16 %v100
      %v149 = vunpack.c.l.b16 %v101
      %v150 = vpack.c.b16 %v135, %v134
      %v151 = vpack.c.b16 %v137, %v136
      %v152 = vpack.c.b16 %v139, %v138
      %v153 = vpack.c.b16 %v141, %v140
      %v154 = vpack.c.b16 %v143, %v142
      %v155 = vpack.c.b16 %v145, %v144
      %v156 = vpack.c.b16 %v147, %v146
      %v157 = vpack.c.b16 %v149, %v148
      %v182 = vunpack.c.l.b16 %v102
      %v183 = vunpack.c.l.b16 %v103
      %v184 = vunpack.c.l.b16 %v104
      %v185 = vunpack.c.l.b16 %v105
      %v186 = vunpack.c.l.b16 %v106
      %v187 = vunpack.c.l.b16 %v107
      %v188 = vunpack.c.l.b16 %v108
      %v189 = vunpack.c.l.b16 %v109
      %v190 = vunpack.c.l.b16 %v110
      %v191 = vunpack.c.l.b16 %v111
      %v192 = vunpack.c.l.b16 %v112
      %v193 = vunpack.c.l.b16 %v113
      %v194 = vunpack.c.l.b16 %v114
      %v195 = vunpack.c.l.b16 %v115
      %v196 = vunpack.c.l.b16 %v116
      %v197 = vunpack.c.l.b16 %v117
      %v198 = vpack.c.b16 %v183, %v182
      %v199 = vpack.c.b16 %v185, %v184
      %v200 = vpack.c.b16 %v187, %v186
      %v201 = vpack.c.b16 %v189, %v188
      %v202 = vpack.c.b16 %v191, %v190
      %v203 = vpack.c.b16 %v193, %v192
      %v204 = vpack.c.b16 %v195, %v194
      %v205 = vpack.c.b16 %v197, %v196
      %214 = vmatprep.subr.bf16.mxu0 0
      %215 = vmatpush1.bf16.xpose.msra.mxu0 %v198
      %216 = vmatprep.subr.bf16.mxu0 0
      %217 = vmatpush1.bf16.xpose.msra.mxu0 %v199
      %218 = vmatprep.subr.bf16.mxu0 0
      %219 = vmatpush1.bf16.xpose.msra.mxu0 %v200
      %220 = vmatprep.subr.bf16.mxu0 0
      %221 = vmatpush1.bf16.xpose.msra.mxu0 %v201
      %222 = vmatprep.subr.bf16.mxu0 0
      %223 = vmatpush1.bf16.xpose.msra.mxu0 %v202
      %224 = vmatprep.subr.bf16.mxu0 0
      %225 = vmatpush1.bf16.xpose.msra.mxu0 %v203
      %226 = vmatprep.subr.bf16.mxu0 0
      %227 = vmatpush1.bf16.xpose.msra.mxu0 %v204
      %228 = vmatprep.subr.bf16.mxu0 0
      %229 = vmatpush1.bf16.xpose.msra.mxu0 %v205
      %230 = vmatprep.subr.bf16.mxu0 0
      %231 = vmatpush1.bf16.xpose.msra.mxu0 0
      %232 = vmatprep.subr.bf16.mxu0 0
      %233 = vmatpush1.bf16.xpose.msra.mxu0 0
      %234 = vmatprep.subr.bf16.mxu0 0
      %235 = vmatpush1.bf16.xpose.msra.mxu0 0
      %236 = vmatprep.subr.bf16.mxu0 0
      %237 = vmatpush1.bf16.xpose.msra.mxu0 0
      %238 = vmatprep.subr.bf16.mxu0 0
      %239 = vmatpush1.bf16.xpose.msra.mxu0 0
      %240 = vmatprep.subr.bf16.mxu0 0
      %241 = vmatpush1.bf16.xpose.msra.mxu0 0
      %242 = vmatprep.subr.bf16.mxu0 0
      %243 = vmatpush1.bf16.xpose.msra.mxu0 0
      %244 = vmatprep.subr.bf16.mxu0 0
      %245 = vmatpush1.bf16.xpose.msra.mxu0 0
      %246 = vmatprep.mubr.bf16.mxu0 0
      %247 = vmatmul.mubr.bf16.gmra.mrb[0].mxu0 %v150
      %v248 = vpop.f32.mrb[0].mxu0
      %v249 = vadd.f32 0.0, %v248
      %v250 = vpop.f32.mrb[0].mxu0
      %v251 = vpop.f32.mrb[0].mxu0
      %v252 = vadd.f32 0.0, %v251
      %v253 = vpop.f32.mrb[0].mxu0
      %254 = vmatprep.mubr.bf16.mxu0 0
      %255 = vmatmul.mubr.bf16.gmra.mrb[0].mxu0 %v151
      %v256 = vpop.f32.mrb[0].mxu0
      %v257 = vadd.f32 0.0, %v256
      %v258 = vpop.f32.mrb[0].mxu0
      %v259 = vpop.f32.mrb[0].mxu0
      %v260 = vadd.f32 0.0, %v259
      %v261 = vpop.f32.mrb[0].mxu0
      %262 = vmatprep.mubr.bf16.mxu0 0
      %263 = vmatmul.mubr.bf16.gmra.mrb[0].mxu0 %v152
      %v264 = vpop.f32.mrb[0].mxu0
      %v265 = vadd.f32 0.0, %v264
      %v266 = vpop.f32.mrb[0].mxu0
      %v267 = vpop.f32.mrb[0].mxu0
      %v268 = vadd.f32 0.0, %v267
      %v269 = vpop.f32.mrb[0].mxu0
      %270 = vmatprep.mubr.bf16.mxu0 0
      %271 = vmatmul.mubr.bf16.gmra.mrb[0].mxu0 %v153
      %v272 = vpop.f32.mrb[0].mxu0
      %v273 = vadd.f32 0.0, %v272
      %v274 = vpop.f32.mrb[0].mxu0
      %v275 = vpop.f32.mrb[0].mxu0
      %v276 = vadd.f32 0.0, %v275
      %v277 = vpop.f32.mrb[0].mxu0
      %278 = vmatprep.mubr.bf16.mxu0 0
      %279 = vmatmul.mubr.bf16.gmra.mrb[0].mxu0 %v154
      %v280 = vpop.f32.mrb[0].mxu0
      %v281 = vadd.f32 0.0, %v280
      %v282 = vpop.f32.mrb[0].mxu0
      %v283 = vpop.f32.mrb[0].mxu0
      %v284 = vadd.f32 0.0, %v283
      %v285 = vpop.f32.mrb[0].mxu0
      %286 = vmatprep.mubr.bf16.mxu0 0
      %287 = vmatmul.mubr.bf16.gmra.mrb[0].mxu0 %v155
      %v288 = vpop.f32.mrb[0].mxu0
      %v289 = vadd.f32 0.0, %v288
      %v290 = vpop.f32.mrb[0].mxu0
      %v291 = vpop.f32.mrb[0].mxu0
      %v292 = vadd.f32 0.0, %v291
      %v293 = vpop.f32.mrb[0].mxu0
      %294 = vmatprep.mubr.bf16.mxu0 0
      %295 = vmatmul.mubr.bf16.gmra.mrb[0].mxu0 %v156
      %v296 = vpop.f32.mrb[0].mxu0
      %v297 = vadd.f32 0.0, %v296
      %v298 = vpop.f32.mrb[0].mxu0
      %v299 = vpop.f32.mrb[0].mxu0
      %v300 = vadd.f32 0.0, %v299
      %v301 = vpop.f32.mrb[0].mxu0
      %302 = vmatprep.mubr.bf16.mxu0 0
      %303 = vmatmul.mubr.bf16.gmra.mrb[0].mxu0 %v157
      %v304 = vpop.f32.mrb[0].mxu0
      %v305 = vadd.f32 0.0, %v304
      %v306 = vpop.f32.mrb[0].mxu0
      %v307 = vpop.f32.mrb[0].mxu0
      %v308 = vadd.f32 0.0, %v307
      %v309 = vpop.f32.mrb[0].mxu0
      %310 = vdwg.mxu0
      %v311 = vld [vmem:[%s2] sm:$0xff]
      %v312 = vld [vmem:[%s2 + $0x8] sm:$0xff]
      %v313 = vld [vmem:[%s2 + $0x10] sm:$0xff]
      %v314 = vld [vmem:[%s2 + $0x18] sm:$0xff]
      %v315 = vld [vmem:[%s2 + $0x20] sm:$0xff]
      %v316 = vld [vmem:[%s2 + $0x28] sm:$0xff]
      %v317 = vld [vmem:[%s2 + $0x30] sm:$0xff]
      %v318 = vld [vmem:[%s2 + $0x38] sm:$0xff]
      %v319 = vld [vmem:[%s2 + $0x40] sm:$0xff]
      %v320 = vld [vmem:[%s2 + $0x48] sm:$0xff]
      %v321 = vld [vmem:[%s2 + $0x50] sm:$0xff]
      %v322 = vld [vmem:[%s2 + $0x58] sm:$0xff]
      %v323 = vld [vmem:[%s2 + $0x60] sm:$0xff]
      %v324 = vld [vmem:[%s2 + $0x68] sm:$0xff]
      %v325 = vld [vmem:[%s2 + $0x70] sm:$0xff]
      %v326 = vld [vmem:[%s2 + $0x78] sm:$0xff]
      %v327 = vld [vmem:[%s3] sm:$0x1]
      %328 = vset.pattern.permute.xlu0 0
      %329 = vperm.xlu0 %328, %v311
      %v330 = vpop.permute.xlu0 %329
      %331 = vset.pattern.permute.xlu0 0
      %332 = vperm.xlu0 %331, %v312
      %v333 = vpop.permute.xlu0 %332
      %334 = vset.pattern.permute.xlu0 0
      %335 = vperm.xlu0 %334, %v313
      %v336 = vpop.permute.xlu0 %335
      %337 = vset.pattern.permute.xlu0 0
      %338 = vperm.xlu0 %337, %v314
      %v339 = vpop.permute.xlu0 %338
      %340 = vset.pattern.permute.xlu0 0
      %341 = vperm.xlu0 %340, %v315
      %v342 = vpop.permute.xlu0 %341
      %343 = vset.pattern.permute.xlu0 0
      %344 = vperm.xlu0 %343, %v316
      %v345 = vpop.permute.xlu0 %344
      %346 = vset.pattern.permute.xlu0 0
      %347 = vperm.xlu0 %346, %v317
      %v348 = vpop.permute.xlu0 %347
      %349 = vset.pattern.permute.xlu0 0
      %350 = vperm.xlu0 %349, %v318
      %v351 = vpop.permute.xlu0 %350
      %352 = vset.pattern.permute.xlu0 0
      %353 = vperm.xlu0 %352, %v319
      %v354 = vpop.permute.xlu0 %353
      %355 = vset.pattern.permute.xlu0 0
      %356 = vperm.xlu0 %355, %v320
      %v357 = vpop.permute.xlu0 %356
      %358 = vset.pattern.permute.xlu0 0
      %359 = vperm.xlu0 %358, %v321
      %v360 = vpop.permute.xlu0 %359
      %361 = vset.pattern.permute.xlu0 0
      %362 = vperm.xlu0 %361, %v322
      %v363 = vpop.permute.xlu0 %362
      %364 = vset.pattern.permute.xlu0 0
      %365 = vperm.xlu0 %364, %v323
      %v366 = vpop.permute.xlu0 %365
      %367 = vset.pattern.permute.xlu0 0
      %368 = vperm.xlu0 %367, %v324
      %v369 = vpop.permute.xlu0 %368
      %370 = vset.pattern.permute.xlu0 0
      %371 = vperm.xlu0 %370, %v325
      %v372 = vpop.permute.xlu0 %371
      %373 = vset.pattern.permute.xlu0 0
      %374 = vperm.xlu0 %373, %v326
      %v375 = vpop.permute.xlu0 %374
      %v376 = vlaneseq
      %v377 = vshrl.u32 %v376, 7
      %v378 = vsub.s32 0, %v377
      %v379 = vrot.slane %v327, %v378
      %vm380 = vcmp.eq.s32.totalorder %v330, %v379
      %vm381 = vcmp.eq.s32.totalorder %v333, %v379
      %vm382 = vcmp.eq.s32.totalorder %v336, %v379
      %vm383 = vcmp.eq.s32.totalorder %v339, %v379
      %vm384 = vcmp.eq.s32.totalorder %v342, %v379
      %vm385 = vcmp.eq.s32.totalorder %v345, %v379
      %vm386 = vcmp.eq.s32.totalorder %v348, %v379
      %vm387 = vcmp.eq.s32.totalorder %v351, %v379
      %vm388 = vcmp.eq.s32.totalorder %v354, %v379
      %vm389 = vcmp.eq.s32.totalorder %v357, %v379
      %vm390 = vcmp.eq.s32.totalorder %v360, %v379
      %vm391 = vcmp.eq.s32.totalorder %v363, %v379
      %vm392 = vcmp.eq.s32.totalorder %v366, %v379
      %vm393 = vcmp.eq.s32.totalorder %v369, %v379
      %vm394 = vcmp.eq.s32.totalorder %v372, %v379
      %vm395 = vcmp.eq.s32.totalorder %v375, %v379
      %v396 = vsel %vm380, %v249, -1e+30
      %v397 = vsel %vm381, %v252, -1e+30
      %v398 = vsel %vm382, %v257, -1e+30
      %v399 = vsel %vm383, %v260, -1e+30
      %v400 = vsel %vm384, %v265, -1e+30
      %v401 = vsel %vm385, %v268, -1e+30
      %v402 = vsel %vm386, %v273, -1e+30
      %v403 = vsel %vm387, %v276, -1e+30
      %v404 = vsel %vm388, %v281, -1e+30
      %v405 = vsel %vm389, %v284, -1e+30
      %v406 = vsel %vm390, %v289, -1e+30
      %v407 = vsel %vm391, %v292, -1e+30
      %v408 = vsel %vm392, %v297, -1e+30
      %v409 = vsel %vm393, %v300, -1e+30
      %v410 = vsel %vm394, %v305, -1e+30
      %v411 = vsel %vm395, %v308, -1e+30
      %v412 = vld [vmem:[#allocation2] sm:$0xff]
      %v413 = vld [vmem:[#allocation2 + $0x8] sm:$0xff]
      %v414 = vld [vmem:[#allocation2 + $0x10] sm:$0xff]
      %v415 = vld [vmem:[#allocation2 + $0x18] sm:$0xff]
      %v416 = vld [vmem:[#allocation2 + $0x20] sm:$0xff]
      %v417 = vld [vmem:[#allocation2 + $0x28] sm:$0xff]
      %v418 = vld [vmem:[#allocation2 + $0x30] sm:$0xff]
      %v419 = vld [vmem:[#allocation2 + $0x38] sm:$0xff]
      %v420 = vld [vmem:[#allocation2 + $0x40] sm:$0xff]
      %v421 = vld [vmem:[#allocation2 + $0x48] sm:$0xff]
      %v422 = vld [vmem:[#allocation2 + $0x50] sm:$0xff]
      %v423 = vld [vmem:[#allocation2 + $0x58] sm:$0xff]
      %v424 = vld [vmem:[#allocation2 + $0x60] sm:$0xff]
      %v425 = vld [vmem:[#allocation2 + $0x68] sm:$0xff]
      %v426 = vld [vmem:[#allocation2 + $0x70] sm:$0xff]
      %v427 = vld [vmem:[#allocation2 + $0x78] sm:$0xff]
      %428 = vmax.xlane.f32.xlu0 %v396
      %v429 = vpop.xlane.xlu0 %428
      %430 = vmax.xlane.f32.xlu0 %v397
      %v431 = vpop.xlane.xlu0 %430
      %432 = vmax.xlane.f32.xlu0 %v398
      %v433 = vpop.xlane.xlu0 %432
      %434 = vmax.xlane.f32.xlu0 %v399
      %v435 = vpop.xlane.xlu0 %434
      %436 = vmax.xlane.f32.xlu0 %v400
      %v437 = vpop.xlane.xlu0 %436
      %438 = vmax.xlane.f32.xlu0 %v401
      %v439 = vpop.xlane.xlu0 %438
      %440 = vmax.xlane.f32.xlu0 %v402
      %v441 = vpop.xlane.xlu0 %440
      %442 = vmax.xlane.f32.xlu0 %v403
      %v443 = vpop.xlane.xlu0 %442
      %444 = vmax.xlane.f32.xlu0 %v404
      %v445 = vpop.xlane.xlu0 %444
      %446 = vmax.xlane.f32.xlu0 %v405
      %v447 = vpop.xlane.xlu0 %446
      %448 = vmax.xlane.f32.xlu0 %v406
      %v449 = vpop.xlane.xlu0 %448
      %450 = vmax.xlane.f32.xlu0 %v407
      %v451 = vpop.xlane.xlu0 %450
      %452 = vmax.xlane.f32.xlu0 %v408
      %v453 = vpop.xlane.xlu0 %452
      %454 = vmax.xlane.f32.xlu0 %v409
      %v455 = vpop.xlane.xlu0 %454
      %456 = vmax.xlane.f32.xlu0 %v410
      %v457 = vpop.xlane.xlu0 %456
      %458 = vmax.xlane.f32.xlu0 %v411
      %v459 = vpop.xlane.xlu0 %458
      %v460 = vmax.f32 %v412, %v429
      %v461 = vmax.f32 %v413, %v431
      %v462 = vmax.f32 %v414, %v433
      %v463 = vmax.f32 %v415, %v435
      %v464 = vmax.f32 %v416, %v437
      %v465 = vmax.f32 %v417, %v439
      %v466 = vmax.f32 %v418, %v441
      %v467 = vmax.f32 %v419, %v443
      %v468 = vmax.f32 %v420, %v445
      %v469 = vmax.f32 %v421, %v447
      %v470 = vmax.f32 %v422, %v449
      %v471 = vmax.f32 %v423, %v451
      %v472 = vmax.f32 %v424, %v453
      %v473 = vmax.f32 %v425, %v455
      %v474 = vmax.f32 %v426, %v457
      %v475 = vmax.f32 %v427, %v459
      %v476 = vsub.f32 %v412, %v460
      %v477 = vsub.f32 %v413, %v461
      %v478 = vsub.f32 %v414, %v462
      %v479 = vsub.f32 %v415, %v463
      %v480 = vsub.f32 %v416, %v464
      %v481 = vsub.f32 %v417, %v465
      %v482 = vsub.f32 %v418, %v466
      %v483 = vsub.f32 %v419, %v467
      %v484 = vsub.f32 %v420, %v468
      %v485 = vsub.f32 %v421, %v469
      %v486 = vsub.f32 %v422, %v470
      %v487 = vsub.f32 %v423, %v471
      %v488 = vsub.f32 %v424, %v472
      %v489 = vsub.f32 %v425, %v473
      %v490 = vsub.f32 %v426, %v474
      %v491 = vsub.f32 %v427, %v475
      %v492 = vmul.f32 %v476, 1.442695
      %v493 = vpow.pop %v492
      %v494 = vmul.f32 %v477, 1.442695
      %v495 = vpow.pop %v494
      %v496 = vmul.f32 %v478, 1.442695
      %v497 = vpow.pop %v496
      %v498 = vmul.f32 %v479, 1.442695
      %v499 = vpow.pop %v498
      %v500 = vmul.f32 %v480, 1.442695
      %v501 = vpow.pop %v500
      %v502 = vmul.f32 %v481, 1.442695
      %v503 = vpow.pop %v502
      %v504 = vmul.f32 %v482, 1.442695
      %v505 = vpow.pop %v504
      %v506 = vmul.f32 %v483, 1.442695
      %v507 = vpow.pop %v506
      %v508 = vmul.f32 %v484, 1.442695
      %v509 = vpow.pop %v508
      %v510 = vmul.f32 %v485, 1.442695
      %v511 = vpow.pop %v510
      %v512 = vmul.f32 %v486, 1.442695
      %v513 = vpow.pop %v512
      %v514 = vmul.f32 %v487, 1.442695
      %v515 = vpow.pop %v514
      %v516 = vmul.f32 %v488, 1.442695
      %v517 = vpow.pop %v516
      %v518 = vmul.f32 %v489, 1.442695
      %v519 = vpow.pop %v518
      %v520 = vmul.f32 %v490, 1.442695
      %v521 = vpow.pop %v520
      %v522 = vmul.f32 %v491, 1.442695
      %v523 = vpow.pop %v522
      %525 = vset.pattern.permute.xlu0 0
      %526 = vperm.xlu0 %525, %v460
      %v527 = vpop.permute.xlu0 %526
      %530 = vset.pattern.permute.xlu0 0
      %531 = vperm.xlu0 %530, %v461
      %v532 = vpop.permute.xlu0 %531
      %535 = vset.pattern.permute.xlu0 0
      %536 = vperm.xlu0 %535, %v462
      %v537 = vpop.permute.xlu0 %536
      %540 = vset.pattern.permute.xlu0 0
      %541 = vperm.xlu0 %540, %v463
      %v542 = vpop.permute.xlu0 %541
      %545 = vset.pattern.permute.xlu0 0
      %546 = vperm.xlu0 %545, %v464
      %v547 = vpop.permute.xlu0 %546
      %550 = vset.pattern.permute.xlu0 0
      %551 = vperm.xlu0 %550, %v465
      %v552 = vpop.permute.xlu0 %551
      %555 = vset.pattern.permute.xlu0 0
      %556 = vperm.xlu0 %555, %v466
      %v557 = vpop.permute.xlu0 %556
      %560 = vset.pattern.permute.xlu0 0
      %561 = vperm.xlu0 %560, %v467
      %v562 = vpop.permute.xlu0 %561
      %565 = vset.pattern.permute.xlu0 0
      %566 = vperm.xlu0 %565, %v468
      %v567 = vpop.permute.xlu0 %566
      %570 = vset.pattern.permute.xlu0 0
      %571 = vperm.xlu0 %570, %v469
      %v572 = vpop.permute.xlu0 %571
      %575 = vset.pattern.permute.xlu0 0
      %576 = vperm.xlu0 %575, %v470
      %v577 = vpop.permute.xlu0 %576
      %580 = vset.pattern.permute.xlu0 0
      %581 = vperm.xlu0 %580, %v471
      %v582 = vpop.permute.xlu0 %581
      %585 = vset.pattern.permute.xlu0 0
      %586 = vperm.xlu0 %585, %v472
      %v587 = vpop.permute.xlu0 %586
      %590 = vset.pattern.permute.xlu0 0
      %591 = vperm.xlu0 %590, %v473
      %v592 = vpop.permute.xlu0 %591
      %595 = vset.pattern.permute.xlu0 0
      %596 = vperm.xlu0 %595, %v474
      %v597 = vpop.permute.xlu0 %596
      %600 = vset.pattern.permute.xlu0 0
      %601 = vperm.xlu0 %600, %v475
      %v602 = vpop.permute.xlu0 %601
      %v604 = vsub.f32 %v396, %v527
      %v605 = vsub.f32 %v397, %v532
      %v606 = vsub.f32 %v398, %v537
      %v607 = vsub.f32 %v399, %v542
      %v608 = vsub.f32 %v400, %v547
      %v609 = vsub.f32 %v401, %v552
      %v610 = vsub.f32 %v402, %v557
      %v611 = vsub.f32 %v403, %v562
      %v612 = vsub.f32 %v404, %v567
      %v613 = vsub.f32 %v405, %v572
      %v614 = vsub.f32 %v406, %v577
      %v615 = vsub.f32 %v407, %v582
      %v616 = vsub.f32 %v408, %v587
      %v617 = vsub.f32 %v409, %v592
      %v618 = vsub.f32 %v410, %v597
      %v619 = vsub.f32 %v411, %v602
      %v620 = vmul.f32 %v604, 1.442695
      %v621 = vpow.pop %v620
      %v622 = vmul.f32 %v605, 1.442695
      %v623 = vpow.pop %v622
      %v624 = vmul.f32 %v606, 1.442695
      %v625 = vpow.pop %v624
      %v626 = vmul.f32 %v607, 1.442695
      %v627 = vpow.pop %v626
      %v628 = vmul.f32 %v608, 1.442695
      %v629 = vpow.pop %v628
      %v630 = vmul.f32 %v609, 1.442695
      %v631 = vpow.pop %v630
      %v632 = vmul.f32 %v610, 1.442695
      %v633 = vpow.pop %v632
      %v634 = vmul.f32 %v611, 1.442695
      %v635 = vpow.pop %v634
      %v636 = vmul.f32 %v612, 1.442695
      %v637 = vpow.pop %v636
      %v638 = vmul.f32 %v613, 1.442695
      %v639 = vpow.pop %v638
      %v640 = vmul.f32 %v614, 1.442695
      %v641 = vpow.pop %v640
      %v642 = vmul.f32 %v615, 1.442695
      %v643 = vpow.pop %v642
      %v644 = vmul.f32 %v616, 1.442695
      %v645 = vpow.pop %v644
      %v646 = vmul.f32 %v617, 1.442695
      %v647 = vpow.pop %v646
      %v648 = vmul.f32 %v618, 1.442695
      %v649 = vpow.pop %v648
      %v650 = vmul.f32 %v619, 1.442695
      %v651 = vpow.pop %v650
      %v652 = vld [vmem:[#allocation3] sm:$0xff]
      %v653 = vld [vmem:[#allocation3 + $0x8] sm:$0xff]
      %v654 = vld [vmem:[#allocation3 + $0x10] sm:$0xff]
      %v655 = vld [vmem:[#allocation3 + $0x18] sm:$0xff]
      %v656 = vld [vmem:[#allocation3 + $0x20] sm:$0xff]
      %v657 = vld [vmem:[#allocation3 + $0x28] sm:$0xff]
      %v658 = vld [vmem:[#allocation3 + $0x30] sm:$0xff]
      %v659 = vld [vmem:[#allocation3 + $0x38] sm:$0xff]
      %v660 = vld [vmem:[#allocation3 + $0x40] sm:$0xff]
      %v661 = vld [vmem:[#allocation3 + $0x48] sm:$0xff]
      %v662 = vld [vmem:[#allocation3 + $0x50] sm:$0xff]
      %v663 = vld [vmem:[#allocation3 + $0x58] sm:$0xff]
      %v664 = vld [vmem:[#allocation3 + $0x60] sm:$0xff]
      %v665 = vld [vmem:[#allocation3 + $0x68] sm:$0xff]
      %v666 = vld [vmem:[#allocation3 + $0x70] sm:$0xff]
      %v667 = vld [vmem:[#allocation3 + $0x78] sm:$0xff]
      %v668 = vmul.f32 %v493, %v652
      %v669 = vmul.f32 %v495, %v653
      %v670 = vmul.f32 %v497, %v654
      %v671 = vmul.f32 %v499, %v655
      %v672 = vmul.f32 %v501, %v656
      %v673 = vmul.f32 %v503, %v657
      %v674 = vmul.f32 %v505, %v658
      %v675 = vmul.f32 %v507, %v659
      %v676 = vmul.f32 %v509, %v660
      %v677 = vmul.f32 %v511, %v661
      %v678 = vmul.f32 %v513, %v662
      %v679 = vmul.f32 %v515, %v663
      %v680 = vmul.f32 %v517, %v664
      %v681 = vmul.f32 %v519, %v665
      %v682 = vmul.f32 %v521, %v666
      %v683 = vmul.f32 %v523, %v667
      %684 = vadd.xlane.f32.xlu0 %v621
      %v685 = vpop.xlane.xlu0 %684
      %686 = vadd.xlane.f32.xlu0 %v623
      %v687 = vpop.xlane.xlu0 %686
      %688 = vadd.xlane.f32.xlu0 %v625
      %v689 = vpop.xlane.xlu0 %688
      %690 = vadd.xlane.f32.xlu0 %v627
      %v691 = vpop.xlane.xlu0 %690
      %692 = vadd.xlane.f32.xlu0 %v629
      %v693 = vpop.xlane.xlu0 %692
      %694 = vadd.xlane.f32.xlu0 %v631
      %v695 = vpop.xlane.xlu0 %694
      %696 = vadd.xlane.f32.xlu0 %v633
      %v697 = vpop.xlane.xlu0 %696
      %698 = vadd.xlane.f32.xlu0 %v635
      %v699 = vpop.xlane.xlu0 %698
      %700 = vadd.xlane.f32.xlu0 %v637
      %v701 = vpop.xlane.xlu0 %700
      %702 = vadd.xlane.f32.xlu0 %v639
      %v703 = vpop.xlane.xlu0 %702
      %704 = vadd.xlane.f32.xlu0 %v641
      %v705 = vpop.xlane.xlu0 %704
      %706 = vadd.xlane.f32.xlu0 %v643
      %v707 = vpop.xlane.xlu0 %706
      %708 = vadd.xlane.f32.xlu0 %v645
      %v709 = vpop.xlane.xlu0 %708
      %710 = vadd.xlane.f32.xlu0 %v647
      %v711 = vpop.xlane.xlu0 %710
      %712 = vadd.xlane.f32.xlu0 %v649
      %v713 = vpop.xlane.xlu0 %712
      %714 = vadd.xlane.f32.xlu0 %v651
      %v715 = vpop.xlane.xlu0 %714
      %v716 = vadd.f32 %v668, %v685
      %v717 = vadd.f32 %v669, %v687
      %v718 = vadd.f32 %v670, %v689
      %v719 = vadd.f32 %v671, %v691
      %v720 = vadd.f32 %v672, %v693
      %v721 = vadd.f32 %v673, %v695
      %v722 = vadd.f32 %v674, %v697
      %v723 = vadd.f32 %v675, %v699
      %v724 = vadd.f32 %v676, %v701
      %v725 = vadd.f32 %v677, %v703
      %v726 = vadd.f32 %v678, %v705
      %v727 = vadd.f32 %v679, %v707
      %v728 = vadd.f32 %v680, %v709
      %v729 = vadd.f32 %v681, %v711
      %v730 = vadd.f32 %v682, %v713
      %v731 = vadd.f32 %v683, %v715
      %vm732 = vcmask 7168
      %733 = vst.msk [vmem:[#allocation3] sm:$0xff] %vm732, %v716
      %734 = vst.msk [vmem:[#allocation3 + $0x8] sm:$0xff] %vm732, %v717
      %735 = vst.msk [vmem:[#allocation3 + $0x10] sm:$0xff] %vm732, %v718
      %736 = vst.msk [vmem:[#allocation3 + $0x18] sm:$0xff] %vm732, %v719
      %737 = vst.msk [vmem:[#allocation3 + $0x20] sm:$0xff] %vm732, %v720
      %738 = vst.msk [vmem:[#allocation3 + $0x28] sm:$0xff] %vm732, %v721
      %739 = vst.msk [vmem:[#allocation3 + $0x30] sm:$0xff] %vm732, %v722
      %740 = vst.msk [vmem:[#allocation3 + $0x38] sm:$0xff] %vm732, %v723
      %741 = vst.msk [vmem:[#allocation3 + $0x40] sm:$0xff] %vm732, %v724
      %742 = vst.msk [vmem:[#allocation3 + $0x48] sm:$0xff] %vm732, %v725
      %743 = vst.msk [vmem:[#allocation3 + $0x50] sm:$0xff] %vm732, %v726
      %744 = vst.msk [vmem:[#allocation3 + $0x58] sm:$0xff] %vm732, %v727
      %745 = vst.msk [vmem:[#allocation3 + $0x60] sm:$0xff] %vm732, %v728
      %746 = vst.msk [vmem:[#allocation3 + $0x68] sm:$0xff] %vm732, %v729
      %747 = vst.msk [vmem:[#allocation3 + $0x70] sm:$0xff] %vm732, %v730
      %748 = vst.msk [vmem:[#allocation3 + $0x78] sm:$0xff] %vm732, %v731
      %v749 = vld [vmem:[#allocation4] sm:$0xff]
      %v750 = vld [vmem:[#allocation4 + $0x8] sm:$0xff]
      %v751 = vld [vmem:[#allocation4 + $0x10] sm:$0xff]
      %v752 = vld [vmem:[#allocation4 + $0x18] sm:$0xff]
      %v753 = vld [vmem:[#allocation4 + $0x20] sm:$0xff]
      %v754 = vld [vmem:[#allocation4 + $0x28] sm:$0xff]
      %v755 = vld [vmem:[#allocation4 + $0x30] sm:$0xff]
      %v756 = vld [vmem:[#allocation4 + $0x38] sm:$0xff]
      %v757 = vld [vmem:[#allocation4 + $0x40] sm:$0xff]
      %v758 = vld [vmem:[#allocation4 + $0x48] sm:$0xff]
      %v759 = vld [vmem:[#allocation4 + $0x50] sm:$0xff]
      %v760 = vld [vmem:[#allocation4 + $0x58] sm:$0xff]
      %v761 = vld [vmem:[#allocation4 + $0x60] sm:$0xff]
      %v762 = vld [vmem:[#allocation4 + $0x68] sm:$0xff]
      %v763 = vld [vmem:[#allocation4 + $0x70] sm:$0xff]
      %v764 = vld [vmem:[#allocation4 + $0x78] sm:$0xff]
      %766 = vset.pattern.permute.xlu0 0
      %767 = vperm.xlu0 %766, %v493
      %v768 = vpop.permute.xlu0 %767
      %771 = vset.pattern.permute.xlu0 0
      %772 = vperm.xlu0 %771, %v495
      %v773 = vpop.permute.xlu0 %772
      %776 = vset.pattern.permute.xlu0 0
      %777 = vperm.xlu0 %776, %v497
      %v778 = vpop.permute.xlu0 %777
      %781 = vset.pattern.permute.xlu0 0
      %782 = vperm.xlu0 %781, %v499
      %v783 = vpop.permute.xlu0 %782
      %786 = vset.pattern.permute.xlu0 0
      %787 = vperm.xlu0 %786, %v501
      %v788 = vpop.permute.xlu0 %787
      %791 = vset.pattern.permute.xlu0 0
      %792 = vperm.xlu0 %791, %v503
      %v793 = vpop.permute.xlu0 %792
      %796 = vset.pattern.permute.xlu0 0
      %797 = vperm.xlu0 %796, %v505
      %v798 = vpop.permute.xlu0 %797
      %801 = vset.pattern.permute.xlu0 0
      %802 = vperm.xlu0 %801, %v507
      %v803 = vpop.permute.xlu0 %802
      %806 = vset.pattern.permute.xlu0 0
      %807 = vperm.xlu0 %806, %v509
      %v808 = vpop.permute.xlu0 %807
      %811 = vset.pattern.permute.xlu0 0
      %812 = vperm.xlu0 %811, %v511
      %v813 = vpop.permute.xlu0 %812
      %816 = vset.pattern.permute.xlu0 0
      %817 = vperm.xlu0 %816, %v513
      %v818 = vpop.permute.xlu0 %817
      %821 = vset.pattern.permute.xlu0 0
      %822 = vperm.xlu0 %821, %v515
      %v823 = vpop.permute.xlu0 %822
      %826 = vset.pattern.permute.xlu0 0
      %827 = vperm.xlu0 %826, %v517
      %v828 = vpop.permute.xlu0 %827
      %831 = vset.pattern.permute.xlu0 0
      %832 = vperm.xlu0 %831, %v519
      %v833 = vpop.permute.xlu0 %832
      %836 = vset.pattern.permute.xlu0 0
      %837 = vperm.xlu0 %836, %v521
      %v838 = vpop.permute.xlu0 %837
      %841 = vset.pattern.permute.xlu0 0
      %842 = vperm.xlu0 %841, %v523
      %v843 = vpop.permute.xlu0 %842
      %v845 = vmul.f32 %v768, %v749
      %v846 = vmul.f32 %v773, %v750
      %v847 = vmul.f32 %v778, %v751
      %v848 = vmul.f32 %v783, %v752
      %v849 = vmul.f32 %v788, %v753
      %v850 = vmul.f32 %v793, %v754
      %v851 = vmul.f32 %v798, %v755
      %v852 = vmul.f32 %v803, %v756
      %v853 = vmul.f32 %v808, %v757
      %v854 = vmul.f32 %v813, %v758
      %v855 = vmul.f32 %v818, %v759
      %v856 = vmul.f32 %v823, %v760
      %v857 = vmul.f32 %v828, %v761
      %v858 = vmul.f32 %v833, %v762
      %v859 = vmul.f32 %v838, %v763
      %v860 = vmul.f32 %v843, %v764
      %v861 = vpack.c.bf16 %v623, %v621
      %v862 = vpack.c.bf16 %v627, %v625
      %v863 = vpack.c.bf16 %v631, %v629
      %v864 = vpack.c.bf16 %v635, %v633
      %v865 = vpack.c.bf16 %v639, %v637
      %v866 = vpack.c.bf16 %v643, %v641
      %v867 = vpack.c.bf16 %v647, %v645
      %v868 = vpack.c.bf16 %v651, %v649
      %869 = vmatprep.subr.bf16.mxu0 0
      %870 = vmatpush1.bf16.msra.mxu0 %v198
      %871 = vmatprep.subr.bf16.mxu0 0
      %872 = vmatpush1.bf16.msra.mxu0 %v199
      %873 = vmatprep.subr.bf16.mxu0 0
      %874 = vmatpush1.bf16.msra.mxu0 %v200
      %875 = vmatprep.subr.bf16.mxu0 0
      %876 = vmatpush1.bf16.msra.mxu0 %v201
      %877 = vmatprep.subr.bf16.mxu0 0
      %878 = vmatpush1.bf16.msra.mxu0 %v202
      %879 = vmatprep.subr.bf16.mxu0 0
      %880 = vmatpush1.bf16.msra.mxu0 %v203
      %881 = vmatprep.subr.bf16.mxu0 0
      %882 = vmatpush1.bf16.msra.mxu0 %v204
      %883 = vmatprep.subr.bf16.mxu0 0
      %884 = vmatpush1.bf16.msra.mxu0 %v205
      %885 = vmatprep.subr.bf16.mxu0 0
      %886 = vmatpush1.bf16.msra.mxu0 0
      %887 = vmatprep.subr.bf16.mxu0 0
      %888 = vmatpush1.bf16.msra.mxu0 0
      %889 = vmatprep.subr.bf16.mxu0 0
      %890 = vmatpush1.bf16.msra.mxu0 0
      %891 = vmatprep.subr.bf16.mxu0 0
      %892 = vmatpush1.bf16.msra.mxu0 0
      %893 = vmatprep.subr.bf16.mxu0 0
      %894 = vmatpush1.bf16.msra.mxu0 0
      %895 = vmatprep.subr.bf16.mxu0 0
      %896 = vmatpush1.bf16.msra.mxu0 0
      %897 = vmatprep.subr.bf16.mxu0 0
      %898 = vmatpush1.bf16.msra.mxu0 0
      %899 = vmatprep.subr.bf16.mxu0 0
      %900 = vmatpush1.bf16.msra.mxu0 0
      %901 = vmatprep.mubr.bf16.mxu0 0
      %902 = vmatmul.mubr.bf16.gmra.mrb[0].mxu0 %v861
      %v903 = vpop.f32.mrb[0].mxu0
      %v904 = vadd.f32 0.0, %v903
      %v905 = vpop.f32.mrb[0].mxu0
      %v906 = vpop.f32.mrb[0].mxu0
      %v907 = vadd.f32 0.0, %v906
      %v908 = vpop.f32.mrb[0].mxu0
      %909 = vmatprep.mubr.bf16.mxu0 0
      %910 = vmatmul.mubr.bf16.gmra.mrb[0].mxu0 %v862
      %v911 = vpop.f32.mrb[0].mxu0
      %v912 = vadd.f32 0.0, %v911
      %v913 = vpop.f32.mrb[0].mxu0
      %v914 = vpop.f32.mrb[0].mxu0
      %v915 = vadd.f32 0.0, %v914
      %v916 = vpop.f32.mrb[0].mxu0
      %917 = vmatprep.mubr.bf16.mxu0 0
      %918 = vmatmul.mubr.bf16.gmra.mrb[0].mxu0 %v863
      %v919 = vpop.f32.mrb[0].mxu0
      %v920 = vadd.f32 0.0, %v919
      %v921 = vpop.f32.mrb[0].mxu0
      %v922 = vpop.f32.mrb[0].mxu0
      %v923 = vadd.f32 0.0, %v922
      %v924 = vpop.f32.mrb[0].mxu0
      %925 = vmatprep.mubr.bf16.mxu0 0
      %926 = vmatmul.mubr.bf16.gmra.mrb[0].mxu0 %v864
      %v927 = vpop.f32.mrb[0].mxu0
      %v928 = vadd.f32 0.0, %v927
      %v929 = vpop.f32.mrb[0].mxu0
      %v930 = vpop.f32.mrb[0].mxu0
      %v931 = vadd.f32 0.0, %v930
      %v932 = vpop.f32.mrb[0].mxu0
      %933 = vmatprep.mubr.bf16.mxu0 0
      %934 = vmatmul.mubr.bf16.gmra.mrb[0].mxu0 %v865
      %v935 = vpop.f32.mrb[0].mxu0
      %v936 = vadd.f32 0.0, %v935
      %v937 = vpop.f32.mrb[0].mxu0
      %v938 = vpop.f32.mrb[0].mxu0
      %v939 = vadd.f32 0.0, %v938
      %v940 = vpop.f32.mrb[0].mxu0
      %941 = vmatprep.mubr.bf16.mxu0 0
      %942 = vmatmul.mubr.bf16.gmra.mrb[0].mxu0 %v866
      %v943 = vpop.f32.mrb[0].mxu0
      %v944 = vadd.f32 0.0, %v943
      %v945 = vpop.f32.mrb[0].mxu0
      %v946 = vpop.f32.mrb[0].mxu0
      %v947 = vadd.f32 0.0, %v946
      %v948 = vpop.f32.mrb[0].mxu0
      %949 = vmatprep.mubr.bf16.mxu0 0
      %950 = vmatmul.mubr.bf16.gmra.mrb[0].mxu0 %v867
      %v951 = vpop.f32.mrb[0].mxu0
      %v952 = vadd.f32 0.0, %v951
      %v953 = vpop.f32.mrb[0].mxu0
      %v954 = vpop.f32.mrb[0].mxu0
      %v955 = vadd.f32 0.0, %v954
      %v956 = vpop.f32.mrb[0].mxu0
      %957 = vmatprep.mubr.bf16.mxu0 0
      %958 = vmatmul.mubr.bf16.gmra.mrb[0].mxu0 %v868
      %v959 = vpop.f32.mrb[0].mxu0
      %v960 = vadd.f32 0.0, %v959
      %v961 = vpop.f32.mrb[0].mxu0
      %v962 = vpop.f32.mrb[0].mxu0
      %v963 = vadd.f32 0.0, %v962
      %v964 = vpop.f32.mrb[0].mxu0
      %965 = vdwg.mxu0
      %v966 = vadd.f32 %v845, %v904
      %v967 = vadd.f32 %v846, %v907
      %v968 = vadd.f32 %v847, %v912
      %v969 = vadd.f32 %v848, %v915
      %v970 = vadd.f32 %v849, %v920
      %v971 = vadd.f32 %v850, %v923
      %v972 = vadd.f32 %v851, %v928
      %v973 = vadd.f32 %v852, %v931
      %v974 = vadd.f32 %v853, %v936
      %v975 = vadd.f32 %v854, %v939
      %v976 = vadd.f32 %v855, %v944
      %v977 = vadd.f32 %v856, %v947
      %v978 = vadd.f32 %v857, %v952
      %v979 = vadd.f32 %v858, %v955
      %v980 = vadd.f32 %v859, %v960
      %v981 = vadd.f32 %v860, %v963
      %982 = vst [vmem:[#allocation4] sm:$0xff] %v966
      %983 = vst [vmem:[#allocation4 + $0x8] sm:$0xff] %v967
      %984 = vst [vmem:[#allocation4 + $0x10] sm:$0xff] %v968
      %985 = vst [vmem:[#allocation4 + $0x18] sm:$0xff] %v969
      %986 = vst [vmem:[#allocation4 + $0x20] sm:$0xff] %v970
      %987 = vst [vmem:[#allocation4 + $0x28] sm:$0xff] %v971
      %988 = vst [vmem:[#allocation4 + $0x30] sm:$0xff] %v972
      %989 = vst [vmem:[#allocation4 + $0x38] sm:$0xff] %v973
      %990 = vst [vmem:[#allocation4 + $0x40] sm:$0xff] %v974
      %991 = vst [vmem:[#allocation4 + $0x48] sm:$0xff] %v975
      %992 = vst [vmem:[#allocation4 + $0x50] sm:$0xff] %v976
      %993 = vst [vmem:[#allocation4 + $0x58] sm:$0xff] %v977
      %994 = vst [vmem:[#allocation4 + $0x60] sm:$0xff] %v978
      %995 = vst [vmem:[#allocation4 + $0x68] sm:$0xff] %v979
      %996 = vst [vmem:[#allocation4 + $0x70] sm:$0xff] %v980
      %997 = vst [vmem:[#allocation4 + $0x78] sm:$0xff] %v981
      %998 = vst.msk [vmem:[#allocation2] sm:$0xff] %vm732, %v460
      %999 = vst.msk [vmem:[#allocation2 + $0x8] sm:$0xff] %vm732, %v461
      %1000 = vst.msk [vmem:[#allocation2 + $0x10] sm:$0xff] %vm732, %v462
      %1001 = vst.msk [vmem:[#allocation2 + $0x18] sm:$0xff] %vm732, %v463
      %1002 = vst.msk [vmem:[#allocation2 + $0x20] sm:$0xff] %vm732, %v464
      %1003 = vst.msk [vmem:[#allocation2 + $0x28] sm:$0xff] %vm732, %v465
      %1004 = vst.msk [vmem:[#allocation2 + $0x30] sm:$0xff] %vm732, %v466
      %1005 = vst.msk [vmem:[#allocation2 + $0x38] sm:$0xff] %vm732, %v467
      %1006 = vst.msk [vmem:[#allocation2 + $0x40] sm:$0xff] %vm732, %v468
      %1007 = vst.msk [vmem:[#allocation2 + $0x48] sm:$0xff] %vm732, %v469
      %1008 = vst.msk [vmem:[#allocation2 + $0x50] sm:$0xff] %vm732, %v470
      %1009 = vst.msk [vmem:[#allocation2 + $0x58] sm:$0xff] %vm732, %v471
      %1010 = vst.msk [vmem:[#allocation2 + $0x60] sm:$0xff] %vm732, %v472
      %1011 = vst.msk [vmem:[#allocation2 + $0x68] sm:$0xff] %vm732, %v473
      %1012 = vst.msk [vmem:[#allocation2 + $0x70] sm:$0xff] %vm732, %v474
      %1013 = vst.msk [vmem:[#allocation2 + $0x78] sm:$0xff] %vm732, %v475
    $region25: #{_segmented_self_attention.1} parent=1 // pred_fallthru
      _
    // Predicated region
    $region26: #{_segmented_self_attention.1} parent=1 // pred_check
      %p1014 = pneg %p23
    $region27: #{_segmented_self_attention.1} parent=1 // pred_check_branch
      %1016 = sbr.rel (%p1014) target = $region29
    $region28: #{_segmented_self_attention.1} parent=1 // pred_region
      %v1017 = vld [vmem:[#allocation3] sm:$0xff]
      %v1018 = vld [vmem:[#allocation3 + $0x8] sm:$0xff]
      %v1019 = vld [vmem:[#allocation3 + $0x10] sm:$0xff]
      %v1020 = vld [vmem:[#allocation3 + $0x18] sm:$0xff]
      %v1021 = vld [vmem:[#allocation3 + $0x20] sm:$0xff]
      %v1022 = vld [vmem:[#allocation3 + $0x28] sm:$0xff]
      %v1023 = vld [vmem:[#allocation3 + $0x30] sm:$0xff]
      %v1024 = vld [vmem:[#allocation3 + $0x38] sm:$0xff]
      %v1025 = vld [vmem:[#allocation3 + $0x40] sm:$0xff]
      %v1026 = vld [vmem:[#allocation3 + $0x48] sm:$0xff]
      %v1027 = vld [vmem:[#allocation3 + $0x50] sm:$0xff]
      %v1028 = vld [vmem:[#allocation3 + $0x58] sm:$0xff]
      %v1029 = vld [vmem:[#allocation3 + $0x60] sm:$0xff]
      %v1030 = vld [vmem:[#allocation3 + $0x68] sm:$0xff]
      %v1031 = vld [vmem:[#allocation3 + $0x70] sm:$0xff]
      %v1032 = vld [vmem:[#allocation3 + $0x78] sm:$0xff]
      %v1033 = vrcp.pop %v1017
      %v1034 = vrcp.pop %v1018
      %v1035 = vrcp.pop %v1019
      %v1036 = vrcp.pop %v1020
      %v1037 = vrcp.pop %v1021
      %v1038 = vrcp.pop %v1022
      %v1039 = vrcp.pop %v1023
      %v1040 = vrcp.pop %v1024
      %v1041 = vrcp.pop %v1025
      %v1042 = vrcp.pop %v1026
      %v1043 = vrcp.pop %v1027
      %v1044 = vrcp.pop %v1028
      %v1045 = vrcp.pop %v1029
      %v1046 = vrcp.pop %v1030
      %v1047 = vrcp.pop %v1031
      %v1048 = vrcp.pop %v1032
      %v1049 = vld [vmem:[#allocation4] sm:$0xff]
      %v1050 = vld [vmem:[#allocation4 + $0x8] sm:$0xff]
      %v1051 = vld [vmem:[#allocation4 + $0x10] sm:$0xff]
      %v1052 = vld [vmem:[#allocation4 + $0x18] sm:$0xff]
      %v1053 = vld [vmem:[#allocation4 + $0x20] sm:$0xff]
      %v1054 = vld [vmem:[#allocation4 + $0x28] sm:$0xff]
      %v1055 = vld [vmem:[#allocation4 + $0x30] sm:$0xff]
      %v1056 = vld [vmem:[#allocation4 + $0x38] sm:$0xff]
      %v1057 = vld [vmem:[#allocation4 + $0x40] sm:$0xff]
      %v1058 = vld [vmem:[#allocation4 + $0x48] sm:$0xff]
      %v1059 = vld [vmem:[#allocation4 + $0x50] sm:$0xff]
      %v1060 = vld [vmem:[#allocation4 + $0x58] sm:$0xff]
      %v1061 = vld [vmem:[#allocation4 + $0x60] sm:$0xff]
      %v1062 = vld [vmem:[#allocation4 + $0x68] sm:$0xff]
      %v1063 = vld [vmem:[#allocation4 + $0x70] sm:$0xff]
      %v1064 = vld [vmem:[#allocation4 + $0x78] sm:$0xff]
      %1066 = vset.pattern.permute.xlu0 0
      %1067 = vperm.xlu0 %1066, %v1033
      %v1068 = vpop.permute.xlu0 %1067
      %1071 = vset.pattern.permute.xlu0 0
      %1072 = vperm.xlu0 %1071, %v1034
      %v1073 = vpop.permute.xlu0 %1072
      %1076 = vset.pattern.permute.xlu0 0
      %1077 = vperm.xlu0 %1076, %v1035
      %v1078 = vpop.permute.xlu0 %1077
      %1081 = vset.pattern.permute.xlu0 0
      %1082 = vperm.xlu0 %1081, %v1036
      %v1083 = vpop.permute.xlu0 %1082
      %1086 = vset.pattern.permute.xlu0 0
      %1087 = vperm.xlu0 %1086, %v1037
      %v1088 = vpop.permute.xlu0 %1087
      %1091 = vset.pattern.permute.xlu0 0
      %1092 = vperm.xlu0 %1091, %v1038
      %v1093 = vpop.permute.xlu0 %1092
      %1096 = vset.pattern.permute.xlu0 0
      %1097 = vperm.xlu0 %1096, %v1039
      %v1098 = vpop.permute.xlu0 %1097
      %1101 = vset.pattern.permute.xlu0 0
      %1102 = vperm.xlu0 %1101, %v1040
      %v1103 = vpop.permute.xlu0 %1102
      %1106 = vset.pattern.permute.xlu0 0
      %1107 = vperm.xlu0 %1106, %v1041
      %v1108 = vpop.permute.xlu0 %1107
      %1111 = vset.pattern.permute.xlu0 0
      %1112 = vperm.xlu0 %1111, %v1042
      %v1113 = vpop.permute.xlu0 %1112
      %1116 = vset.pattern.permute.xlu0 0
      %1117 = vperm.xlu0 %1116, %v1043
      %v1118 = vpop.permute.xlu0 %1117
      %1121 = vset.pattern.permute.xlu0 0
      %1122 = vperm.xlu0 %1121, %v1044
      %v1123 = vpop.permute.xlu0 %1122
      %1126 = vset.pattern.permute.xlu0 0
      %1127 = vperm.xlu0 %1126, %v1045
      %v1128 = vpop.permute.xlu0 %1127
      %1131 = vset.pattern.permute.xlu0 0
      %1132 = vperm.xlu0 %1131, %v1046
      %v1133 = vpop.permute.xlu0 %1132
      %1136 = vset.pattern.permute.xlu0 0
      %1137 = vperm.xlu0 %1136, %v1047
      %v1138 = vpop.permute.xlu0 %1137
      %1141 = vset.pattern.permute.xlu0 0
      %1142 = vperm.xlu0 %1141, %v1048
      %v1143 = vpop.permute.xlu0 %1142
      %v1145 = vmul.f32 %v1049, %v1068
      %v1146 = vmul.f32 %v1050, %v1073
      %v1147 = vmul.f32 %v1051, %v1078
      %v1148 = vmul.f32 %v1052, %v1083
      %v1149 = vmul.f32 %v1053, %v1088
      %v1150 = vmul.f32 %v1054, %v1093
      %v1151 = vmul.f32 %v1055, %v1098
      %v1152 = vmul.f32 %v1056, %v1103
      %v1153 = vmul.f32 %v1057, %v1108
      %v1154 = vmul.f32 %v1058, %v1113
      %v1155 = vmul.f32 %v1059, %v1118
      %v1156 = vmul.f32 %v1060, %v1123
      %v1157 = vmul.f32 %v1061, %v1128
      %v1158 = vmul.f32 %v1062, %v1133
      %v1159 = vmul.f32 %v1063, %v1138
      %v1160 = vmul.f32 %v1064, %v1143
      %1161 = vst [vmem:[#allocation8] sm:$0xff] %v1145
      %1162 = vst [vmem:[#allocation8 + $0x8] sm:$0xff] %v1146
      %1163 = vst [vmem:[#allocation8 + $0x10] sm:$0xff] %v1147
      %1164 = vst [vmem:[#allocation8 + $0x18] sm:$0xff] %v1148
      %1165 = vst [vmem:[#allocation8 + $0x20] sm:$0xff] %v1149
      %1166 = vst [vmem:[#allocation8 + $0x28] sm:$0xff] %v1150
      %1167 = vst [vmem:[#allocation8 + $0x30] sm:$0xff] %v1151
      %1168 = vst [vmem:[#allocation8 + $0x38] sm:$0xff] %v1152
      %1169 = vst [vmem:[#allocation8 + $0x40] sm:$0xff] %v1153
      %1170 = vst [vmem:[#allocation8 + $0x48] sm:$0xff] %v1154
      %1171 = vst [vmem:[#allocation8 + $0x50] sm:$0xff] %v1155
      %1172 = vst [vmem:[#allocation8 + $0x58] sm:$0xff] %v1156
      %1173 = vst [vmem:[#allocation8 + $0x60] sm:$0xff] %v1157
      %1174 = vst [vmem:[#allocation8 + $0x68] sm:$0xff] %v1158
      %1175 = vst [vmem:[#allocation8 + $0x70] sm:$0xff] %v1159
      %1176 = vst [vmem:[#allocation8 + $0x78] sm:$0xff] %v1160
    $region29: #{_segmented_self_attention.1} parent=1 // pred_fallthru
      _
    // Predicated region
    $region30: #{_segmented_self_attention.1} parent=1 // pred_check
      _
    $region31: #{_segmented_self_attention.1} parent=1 // pred_check_branch
      %1178 = sbr.rel (0) target = $region33
    $region32: #{_segmented_self_attention.1} parent=1 // pred_region
      %s1180 = ssub.s32 2048, 2048
      %1181 = vsyncadd [#allocation9], %s1180
      %s1182 = sshll.u32 [#allocation8], 4
      %s1183 = int_to_ptr.vmem [resolvable:$true] %s1182
      %1188 = dma.vmem_to_hbm [thread:$0]  %s1183, 2048, %s6, [#allocation9], 128, 128, 8
    $region33: #{_segmented_self_attention.1} parent=1 // pred_fallthru
      _
    // Predicated region
    $region34: #{_segmented_self_attention.1} parent=1 // pred_check
      _
    $region35: #{_segmented_self_attention.1} parent=1 // pred_check_branch
      %1190 = sbr.rel (0) target = $region37
    $region36: #{_segmented_self_attention.1} parent=1 // pred_region
      %1191 = dma.done [#allocation9], 2048
    $region37: #{_segmented_self_attention.1} parent=1 // pred_fallthru
      _
    %1192 = vsyncpa [#allocation9], 1

</llo_original>
